<compile_context>
chip_gen: v7x
topology: tpu7x:2x2x1
jax: 0.10.0
libtpu: 0.0.40
codegen_flags: <defaults>
</compile_context>

<pallas_src>
import jax
import jax.numpy as jnp
from jax import lax
from jax.experimental import pallas as pl
from jax.experimental.pallas import tpu as pltpu

NUM_GROUPS = 32
EPS = 1e-5


# --------------------------------------------------------------------------
# Kernel 1: GroupNorm affine + fused QKV projection
# --------------------------------------------------------------------------
def norm_qkv_kernel(x_ref, ab_ref, wqkv_ref, bqkv_ref, qkv_ref):
    x = x_ref[0]                         # (TN, C) f32
    ab = ab_ref[0]                       # (2, C)  f32
    a = ab[0:1, :]                       # per-channel scale (inv_std * gamma)
    b = ab[1:2, :]                       # per-channel shift (beta - mean * a)
    h = (x * a + b).astype(jnp.bfloat16)
    qkv = jnp.dot(h, wqkv_ref[...],
                  preferred_element_type=jnp.float32) + bqkv_ref[...]
    qkv_ref[0] = qkv.astype(jnp.bfloat16)


# --------------------------------------------------------------------------
# Kernel 2: flash attention (online softmax) + out projection + residual
# --------------------------------------------------------------------------
def flash_attn_out_kernel(q_ref, k_ref, v_ref, x_ref, wo_ref, bo_ref,
                          y_ref, m_sc, l_sc, acc_sc):
    kv = pl.program_id(2)

    @pl.when(kv == 0)
    def _():
        m_sc[...] = jnp.full(m_sc.shape, -jnp.inf, jnp.float32)
        l_sc[...] = jnp.zeros(l_sc.shape, jnp.float32)
        acc_sc[...] = jnp.zeros(acc_sc.shape, jnp.float32)

    q = q_ref[0]     # (TQ, C)  bf16, already scaled by C**-0.5
    k = k_ref[0]     # (TKV, C) bf16
    v = v_ref[0]     # (TKV, C) bf16

    # scores: contract last dims of q and k (no explicit k.T materialization)
    s = lax.dot_general(q, k, (((1,), (1,)), ((), ())),
                        preferred_element_type=jnp.float32)   # (TQ, TKV) f32

    m_prev = m_sc[...]
    m_new = jnp.maximum(m_prev, jnp.max(s, axis=-1, keepdims=True))
    alpha = jnp.exp(m_prev - m_new)                            # EUP
    p = jnp.exp(s - m_new)                                     # f32 softmax math
    l_sc[...] = alpha * l_sc[...] + jnp.sum(p, axis=-1, keepdims=True)
    acc_sc[...] = alpha * acc_sc[...] + jnp.dot(
        p.astype(jnp.bfloat16), v, preferred_element_type=jnp.float32)
    m_sc[...] = m_new

    @pl.when(kv == pl.num_programs(2) - 1)
    def _():
        attn = acc_sc[...] * pl.reciprocal(l_sc[...], approx=True)   # (TQ, C)
        out = jnp.dot(attn.astype(jnp.bfloat16), wo_ref[...],
                      preferred_element_type=jnp.float32) + bo_ref[...]
        y_ref[0] = x_ref[0] + out


# --------------------------------------------------------------------------
# Wrapper
# --------------------------------------------------------------------------
def _pick_tile(n, desired):
    """Largest divisor of n that is <= desired and sublane-friendly."""
    t = min(desired, n)
    while t > 1 and n % t != 0:
        t //= 2
    if n % t != 0 or (t != n and t % 16 != 0):
        t = n
    return t


def _prepare_inputs(x_nchw, params):
    """NCHW -> (B,N,C); folded GroupNorm affine; fused/cast weights."""
    B, C, H, W = x_nchw.shape
    N = H * W
    cpg = C // NUM_GROUPS
    x_bnc = jnp.transpose(x_nchw, (0, 2, 3, 1)).reshape(B, N, C)
    x_bnc = x_bnc.astype(jnp.float32)

    # GroupNorm statistics — single pass (E[x], E[x^2]) in f32, plain JAX.
    xg = x_bnc.reshape(B, N, NUM_GROUPS, cpg)
    mean_g = jnp.mean(xg, axis=(1, 3))                                  # (B, G)
    mean_sq_g = jnp.mean(xg * xg, axis=(1, 3))                          # (B, G)
    var_g = jnp.maximum(mean_sq_g - mean_g * mean_g, 0.0)
    inv_std_g = lax.rsqrt(var_g + EPS)
    mean_c = jnp.repeat(mean_g, cpg, axis=1)                            # (B, C)
    inv_std_c = jnp.repeat(inv_std_g, cpg, axis=1)
    gamma = params["gamma"][None, :].astype(jnp.float32)
    beta = params["beta"][None, :].astype(jnp.float32)
    a = inv_std_c * gamma
    b = beta - mean_c * a
    ab = jnp.stack([a, b], axis=1).astype(jnp.float32)                  # (B, 2, C)

    # Fused QKV weights (Cin, 3*Cout), attention scale folded into q.
    scale = jnp.float32(C) ** -0.5
    wq = params["wq"].T * scale
    wk = params["wk"].T
    wv = params["wv"].T
    wqkv = jnp.concatenate([wq, wk, wv], axis=1).astype(jnp.bfloat16)   # (C, 3C)
    bqkv = jnp.concatenate(
        [params["bq"] * scale, params["bk"], params["bv"]]
    ).reshape(1, 3 * C).astype(jnp.float32)
    wo = params["wo"].T.astype(jnp.bfloat16)                            # (C, C)
    bo = params["bo"].reshape(1, C).astype(jnp.float32)
    return x_bnc, ab, wqkv, bqkv, wo, bo


def attn_block_pallas(x_nchw, params, *, tn=None, tq=None, tkv=None):
    """x_nchw: (B, C, H, W) float32.  params: PyTorch-convention weights."""
    B, C, H, W = x_nchw.shape
    assert C % NUM_GROUPS == 0
    N = H * W

    x_bnc, ab, wqkv, bqkv, wo, bo = _prepare_inputs(x_nchw, params)

    tn = _pick_tile(N, 512 if tn is None else tn)
    tq = _pick_tile(N, 256 if tq is None else tq)
    tkv = _pick_tile(N, 512 if tkv is None else tkv)

    # ---- kernel 1: GroupNorm affine + fused QKV projection -----------------
    qkv = pl.pallas_call(
        norm_qkv_kernel,
        out_shape=jax.ShapeDtypeStruct((B, N, 3 * C), jnp.bfloat16),
        grid_spec=pltpu.PrefetchScalarGridSpec(
            num_scalar_prefetch=0,
            grid=(B, N // tn),
            in_specs=[
                pl.BlockSpec((1, tn, C), lambda b, n: (b, n, 0)),    # x
                pl.BlockSpec((1, 2, C), lambda b, n: (b, 0, 0)),     # affine a,b
                pl.BlockSpec((C, 3 * C), lambda b, n: (0, 0)),       # wqkv
                pl.BlockSpec((1, 3 * C), lambda b, n: (0, 0)),       # bqkv
            ],
            out_specs=pl.BlockSpec((1, tn, 3 * C), lambda b, n: (b, n, 0)),
        ),
        compiler_params=pltpu.CompilerParams(
            dimension_semantics=("parallel", "parallel")),
    )(x_bnc, ab, wqkv, bqkv)

    # ---- kernel 2: flash attention + out conv + residual -------------------
    y_bnc = pl.pallas_call(
        flash_attn_out_kernel,
        out_shape=jax.ShapeDtypeStruct((B, N, C), jnp.float32),
        grid_spec=pltpu.PrefetchScalarGridSpec(
            num_scalar_prefetch=0,
            grid=(B, N // tq, N // tkv),
            in_specs=[
                pl.BlockSpec((1, tq, C), lambda b, qi, ki: (b, qi, 0)),   # q
                pl.BlockSpec((1, tkv, C), lambda b, qi, ki: (b, ki, 1)),  # k
                pl.BlockSpec((1, tkv, C), lambda b, qi, ki: (b, ki, 2)),  # v
                pl.BlockSpec((1, tq, C), lambda b, qi, ki: (b, qi, 0)),   # x (res)
                pl.BlockSpec((C, C), lambda b, qi, ki: (0, 0)),           # wo
                pl.BlockSpec((1, C), lambda b, qi, ki: (0, 0)),           # bo
            ],
            out_specs=pl.BlockSpec((1, tq, C), lambda b, qi, ki: (b, qi, 0)),
            scratch_shapes=[
                pltpu.VMEM((tq, 1), jnp.float32),   # running max
                pltpu.VMEM((tq, 1), jnp.float32),   # running denom
                pltpu.VMEM((tq, C), jnp.float32),   # output accumulator
            ],
        ),
        compiler_params=pltpu.CompilerParams(
            dimension_semantics=("parallel", "parallel", "arbitrary")),
    )(qkv, qkv, qkv, x_bnc, wo, bo)

    return jnp.transpose(y_bnc.reshape(B, H, W, C), (0, 3, 1, 2))


# --------------------------------------------------------------------------
# References
# --------------------------------------------------------------------------
def attn_block_reference(x, params):
    """Pure-JAX f32 reference mirroring the PyTorch forward (NCHW)."""
    B, C, H, W = x.shape
    cpg = C // NUM_GROUPS
    xg = x.reshape(B, NUM_GROUPS, cpg, H, W)
    mean = xg.mean(axis=(2, 3, 4), keepdims=True)
    var = xg.var(axis=(2, 3, 4), keepdims=True)
    h = (xg - mean) / jnp.sqrt(var + EPS)
    h = h.reshape(B, C, H, W)
    h = h * params["gamma"][None, :, None, None] + params["beta"][None, :, None, None]

    def conv1x1(t, w, b):
        return jnp.einsum("bchw,oc->bohw", t, w) + b[None, :, None, None]

    q = conv1x1(h, params["wq"], params["bq"])
    k = conv1x1(h, params["wk"], params["bk"])
    v = conv1x1(h, params["wv"], params["bv"])

    z = H * W
    qf = q.reshape(B, C, z).transpose(0, 2, 1)
    kf = k.reshape(B, C, z).transpose(0, 2, 1)
    vf = v.reshape(B, C, z).transpose(0, 2, 1)
    w_ = jnp.einsum("bic,bjc->bij", qf, kf) * (C ** -0.5)
    w_ = jax.nn.softmax(w_, axis=-1)
    hf = jnp.einsum("bij,bjc->bic", w_, vf)
    h = hf.transpose(0, 2, 1).reshape(B, C, H, W)
    h = conv1x1(h, params["wo"], params["bo"])
    return x + h


def attn_block_reference_bf16(x_nchw, params):
    """Matched-precision (bf16 MXU operands, f32 accumulation) JAX reference."""
    B, C, H, W = x_nchw.shape
    x_bnc, ab, wqkv, bqkv, wo, bo = _prepare_inputs(x_nchw, params)
    a = ab[:, 0:1, :]
    b = ab[:, 1:2, :]
    h = (x_bnc * a + b).astype(jnp.bfloat16)
    qkv = (jnp.einsum("bnc,cd->bnd", h, wqkv,
                      preferred_element_type=jnp.float32) + bqkv)
    qkv = qkv.astype(jnp.bfloat16)
    q, k, v = qkv[..., :C], qkv[..., C:2 * C], qkv[..., 2 * C:]
    s = jnp.einsum("bqc,bkc->bqk", q, k, preferred_element_type=jnp.float32)
    m = jnp.max(s, axis=-1, keepdims=True)
    p = jnp.exp(s - m)
    l = jnp.sum(p, axis=-1, keepdims=True)
    acc = jnp.einsum("bqk,bkc->bqc", p.astype(jnp.bfloat16), v,
                     preferred_element_type=jnp.float32)
    attn = (acc / l).astype(jnp.bfloat16)
    out = jnp.einsum("bnc,cd->bnd", attn, wo,
                     preferred_element_type=jnp.float32) + bo
    y_bnc = x_bnc + out
    return jnp.transpose(y_bnc.reshape(B, H, W, C), (0, 3, 1, 2))


def make_params(key, C):
    keys = jax.random.split(key, 10)
    std = 1.0 / jnp.sqrt(C)
    return {
        "gamma": jax.random.normal(keys[0], (C,), jnp.float32) * 0.1 + 1.0,
        "beta": jax.random.normal(keys[1], (C,), jnp.float32) * 0.1,
        "wq": jax.random.normal(keys[2], (C, C), jnp.float32) * std,
        "bq": jax.random.normal(keys[3], (C,), jnp.float32) * 0.01,
        "wk": jax.random.normal(keys[4], (C, C), jnp.float32) * std,
        "bk": jax.random.normal(keys[5], (C,), jnp.float32) * 0.01,
        "wv": jax.random.normal(keys[6], (C, C), jnp.float32) * std,
        "bv": jax.random.normal(keys[7], (C,), jnp.float32) * 0.01,
        "wo": jax.random.normal(keys[8], (C, C), jnp.float32) * std,
        "bo": jax.random.normal(keys[9], (C,), jnp.float32) * 0.01,
    }


if __name__ == "__main__":
    # GroupNorm(32, C) requires C % 32 == 0; C=128 keeps the lane dim dense.
    B, C, H, W = 2, 128, 8, 8          # N = 64 spatial positions
    key = jax.random.PRNGKey(0)
    kx, kp = jax.random.split(key)
    x = jax.random.normal(kx, (B, C, H, W), jnp.float32)
    params = make_params(kp, C)

    # small tiles so the online-softmax KV loop is actually exercised (2x2 tiles)
    y = jax.block_until_ready(attn_block_pallas(x, params, tn=32, tq=32, tkv=32))

    y_match = jax.block_until_ready(attn_block_reference_bf16(x, params))
    y_ref = jax.block_until_ready(attn_block_reference(x, params))

    err_match = float(jnp.max(jnp.abs(y - y_match)))
    err_full = float(jnp.max(jnp.abs(y - y_ref)))
    assert y.shape == (B, C, H, W)
    # tight check vs matched-precision (bf16 MXU) reference
    assert err_match < 2e-2, ("kernel vs matched-precision reference", err_match)
    # looser check vs exact f32 module semantics (tolerance reflects bf16 MXU)
    assert jnp.allclose(y, y_ref, atol=1e-1, rtol=1e-1), (
        "kernel vs f32 reference", err_full)
    print("KERNEL_OK")
</pallas_src>

<mosaic_0001>
module attributes {stable_mosaic.version = 11 : i64} {
  func.func @norm_qkv_kernel(%arg0: i32, %arg1: i32, %arg2: memref<1x32x128xf32, #tpu.memory_space<vmem>>, %arg3: memref<1x2x128xf32, #tpu.memory_space<vmem>>, %arg4: memref<128x384xbf16, #tpu.memory_space<vmem>>, %arg5: memref<1x384xf32, #tpu.memory_space<vmem>>, %arg6: memref<1x32x384xbf16, #tpu.memory_space<vmem>>) attributes {dimension_semantics = [#tpu.dimension_semantics<parallel>, #tpu.dimension_semantics<parallel>], iteration_bounds = array<i64: 2, 2>, scalar_prefetch = 0 : i64, scratch_operands = 0 : i64, tpu.core_type = #tpu.core_type<tc>, window_params = [{transform_indices = @transform_0, window_bounds = array<i64: 1, 32, 128>}, {transform_indices = @transform_1, window_bounds = array<i64: 1, 2, 128>}, {pipeline_mode = #tpu.pipeline_mode<synchronous>, transform_indices = @transform_2, window_bounds = array<i64: 128, 384>}, {pipeline_mode = #tpu.pipeline_mode<synchronous>, transform_indices = @transform_3, window_bounds = array<i64: 1, 384>}, {transform_indices = @transform_4, window_bounds = array<i64: 1, 32, 384>}]} {
    %c0 = arith.constant 0 : index
    %c0_0 = arith.constant 0 : index
    %c0_1 = arith.constant 0 : index
    %0 = vector.load %arg2[%c0, %c0_0, %c0_1] : memref<1x32x128xf32, #tpu.memory_space<vmem>>, vector<1x32x128xf32>
    %1 = vector.shape_cast %0 : vector<1x32x128xf32> to vector<32x128xf32>
    %c0_2 = arith.constant 0 : index
    %c0_3 = arith.constant 0 : index
    %c0_4 = arith.constant 0 : index
    %2 = vector.load %arg3[%c0_2, %c0_3, %c0_4] : memref<1x2x128xf32, #tpu.memory_space<vmem>>, vector<1x2x128xf32>
    %3 = vector.shape_cast %2 : vector<1x2x128xf32> to vector<2x128xf32>
    %4 = vector.extract_strided_slice %3 {offsets = [0, 0], sizes = [1, 128], strides = [1, 1]} : vector<2x128xf32> to vector<1x128xf32>
    %5 = vector.extract_strided_slice %3 {offsets = [1, 0], sizes = [1, 128], strides = [1, 1]} : vector<2x128xf32> to vector<1x128xf32>
    %6 = vector.broadcast %4 : vector<1x128xf32> to vector<32x128xf32>
    %7 = arith.mulf %1, %6 : vector<32x128xf32>
    %8 = vector.broadcast %5 : vector<1x128xf32> to vector<32x128xf32>
    %9 = arith.addf %7, %8 : vector<32x128xf32>
    %10 = arith.truncf %9 : vector<32x128xf32> to vector<32x128xbf16>
    %c0_5 = arith.constant 0 : index
    %c0_6 = arith.constant 0 : index
    %11 = vector.load %arg4[%c0_5, %c0_6] : memref<128x384xbf16, #tpu.memory_space<vmem>>, vector<128x384xbf16>
    %cst = arith.constant dense<0.000000e+00> : vector<32x384xf32>
    %12 = tpu.matmul %10, %11, %cst {dimension_numbers = #tpu.dot_dimension_numbers<[1], [0], [0], [1], [0, 0, 1, 1], [], []>} : vector<32x128xbf16>, vector<128x384xbf16>, vector<32x384xf32> -> vector<32x384xf32>
    %c0_7 = arith.constant 0 : index
    %c0_8 = arith.constant 0 : index
    %13 = vector.load %arg5[%c0_7, %c0_8] : memref<1x384xf32, #tpu.memory_space<vmem>>, vector<1x384xf32>
    %14 = vector.broadcast %13 : vector<1x384xf32> to vector<32x384xf32>
    %15 = arith.addf %12, %14 : vector<32x384xf32>
    %16 = arith.truncf %15 : vector<32x384xf32> to vector<32x384xbf16>
    %c0_9 = arith.constant 0 : index
    %c0_10 = arith.constant 0 : index
    %c0_11 = arith.constant 0 : index
    %17 = vector.load %arg6[%c0_9, %c0_10, %c0_11] : memref<1x32x384xbf16, #tpu.memory_space<vmem>>, vector<1x32x384xbf16>
    %18 = vector.shape_cast %17 : vector<1x32x384xbf16> to vector<32x384xbf16>
    %19 = vector.shape_cast %16 : vector<32x384xbf16> to vector<1x32x384xbf16>
    tpu.vector_store %arg6[%c0_9, %c0_10, %c0_11], %19 {strides = array<i32>} : memref<1x32x384xbf16, #tpu.memory_space<vmem>>, vector<1x32x384xbf16>,
    return
  }
  func.func @transform_0(%arg0: i32, %arg1: i32) -> (i32, i32, i32) {
    %c0_i32 = arith.constant 0 : i32
    %c0_i32_0 = arith.constant 0 : i32
    return %arg0, %arg1, %c0_i32 : i32, i32, i32
  }
  func.func @transform_1(%arg0: i32, %arg1: i32) -> (i32, i32, i32) {
    %c0_i32 = arith.constant 0 : i32
    %c0_i32_0 = arith.constant 0 : i32
    %c0_i32_1 = arith.constant 0 : i32
    return %arg0, %c0_i32, %c0_i32_0 : i32, i32, i32
  }
  func.func @transform_2(%arg0: i32, %arg1: i32) -> (i32, i32) {
    %c0_i32 = arith.constant 0 : i32
    %c0_i32_0 = arith.constant 0 : i32
    %c0_i32_1 = arith.constant 0 : i32
    return %c0_i32, %c0_i32_0 : i32, i32
  }
  func.func @transform_3(%arg0: i32, %arg1: i32) -> (i32, i32) {
    %c0_i32 = arith.constant 0 : i32
    %c0_i32_0 = arith.constant 0 : i32
    %c0_i32_1 = arith.constant 0 : i32
    return %c0_i32, %c0_i32_0 : i32, i32
  }
  func.func @transform_4(%arg0: i32, %arg1: i32) -> (i32, i32, i32) {
    %c0_i32 = arith.constant 0 : i32
    %c0_i32_0 = arith.constant 0 : i32
    return %arg0, %arg1, %c0_i32 : i32, i32, i32
  }
}

</mosaic_0001>

<llo_original>
// kernel: tpu_custom_call.1
$region0: #{tpu_custom_call.1}
  #allocation0 [shape = 'u32[]', space=smem, size = 0x4, offset = 0x4, fixed_abs, tag = 'smem constant byte address 0x4 - core index']
  #allocation1 [shape = 'u32[144,128]{1,0:T(1,128)}', space=vmem, size = 0x12000, scoped, tag = 'internal scratch']
  %s0 = inlined_call_operand.hbm [shape: f32[2,64,128], index: 0, kind: input, shape index: {}]
  %s1 = inlined_call_operand.hbm [shape: f32[2,2,128], index: 1, kind: input, shape index: {}]
  %s2 = inlined_call_operand.hbm [shape: bf16[128,384], index: 2, kind: input, shape index: {}]
  %s3 = inlined_call_operand.vmem [shape: f32[1,384], index: 3, kind: input, shape index: {}]
  %s4 = inlined_call_operand.hbm [shape: bf16[2,64,384], index: 4, kind: output, shape index: {}]
  %s5 = sld [smem:[#allocation0]]
  $region61: #{tpu_custom_call.1} parent=0
    _
  %s7 = ssub.s32 1, %s5
  %s8 = scalar_select 0, %s7, %s5
  $region1: #{tpu_custom_call.1} parent=0
    #allocation2 [shape = 'u8[32768]{0}', space=vmem, size = 0x8000, scoped, tag = 'input window, operand 0']
    #allocation3 [shape = 's32[2]{0}', space=sflag, size = 0x8, scoped, tag = 'scoped memory for tpu_custom_call.1']
    #allocation4 [shape = 's32[2]{0}', space=sflag, size = 0x8, scoped, tag = 'scoped memory for tpu_custom_call.1']
    #allocation5 [shape = 'u8[2048]{0}', space=vmem, size = 0x800, scoped, tag = 'input window, operand 1']
    #allocation6 [shape = 's32[2]{0}', space=sflag, size = 0x8, scoped, tag = 'scoped memory for tpu_custom_call.1']
    #allocation7 [shape = 'u8[98304]{0}', space=vmem, size = 0x18000, scoped, tag = 'input window, operand 2, single buffered']
    #allocation8 [shape = 'u8[49152]{0}', space=vmem, size = 0xc000, scoped, tag = 'output window, operand 0']
    %9 = vsyncpa [#allocation3], 0
    %s10 = scalar_lea.sflag [#allocation3], 1
    %11 = vsyncpa %s10, 0
    %12 = vsyncpa [#allocation6], 0
    %s13 = scalar_lea.sflag [#allocation6], 1
    %14 = vsyncpa %s13, 0
    %15 = vsyncpa [#allocation4], 0
    %s16 = scalar_lea.sflag [#allocation4], 1
    %17 = vsyncpa %s16, 0
    loop: start=0, step=1, limit=6
    $region2: #{tpu_custom_call.1} parent=1 // loop_pre_header
      _
    $region3: #{tpu_custom_call.1} parent=1 // loop_header
      %s19 = sphi 0, %s23
      %p20 = scmp.ge.s32.totalorder %s19, 6
      %s26 = sphi 0, %s38
      %s27 = sphi 0, %s34
      %s28 = sphi 0, %s26
      %s29 = sphi 0, %s27
      %s30 = sphi 0, %s28
      %s31 = sphi 0, %s29
      %s43 = sphi 0, %s45
      %s46 = sphi 0, %s43
      %s47 = sphi 0, %s46
      %s63 = sphi 0, %s47
      %s69 = sphi 0, %s71
      %s72 = sphi 0, %s69
      %s73 = sphi 0, %s72
      %s89 = sphi 0, %s73
      %s93 = sphi 0, %s93
      %s95 = sphi 0, %s93
      %s96 = sphi 0, %s95
      %s110 = sphi 0, %s96
      %s114 = sphi 0, %s114
      %s116 = sphi 0, %s114
      %s117 = sphi 0, %s116
      %s131 = sphi 0, %s117
      %s139 = sphi 0, %s141
      %s142 = sphi 0, %s139
      %s143 = sphi 0, %s142
      %s159 = sphi 0, %s143
    $region4: #{tpu_custom_call.1} parent=1 // loop_header_branch
      %22 = sbr.rel (%p20) target = $region8
    $region5: #{tpu_custom_call.1} parent=1 // loop_body
      %s24 = ssub.s32 %s19, 1
      %s25 = ssub.s32 %s19, 2
      %s32 = sadd.s32 1, %s27
      %p33 = scmp.ge.s32.totalorder %s32, 2
      %s34 = scalar_select %p33, 0, %s32
      %s35 = sadd.s32 1, %s26
      %s36 = scalar_select %p33, %s35, %s26
      %p37 = scmp.ge.s32.totalorder %s36, 2
      %s38 = scalar_select %p37, 0, %s36
      %s39 = ssub.s32 %s26, %s38
      %s40 = ssub.s32 %s27, %s34
      %s41 = sor.u32 %s39, %s40
      %p42 = scmp.eq.s32.totalorder %s41, 0
      %s44 = sadd.s32 %s43, 1
      %s45 = scalar_select %p42, %s43, %s44
      %p48 = pneg %p42
      %p49 = scmp.eq.s32.totalorder %s19, 3
      %p50 = por %p48, %p49
      %p51 = scmp.ne.s32.totalorder %s43, %s46
      %p52 = scmp.eq.s32.totalorder %s19, 0
      %p53 = por %p51, %p52
      %p54 = scmp.ne.s32.totalorder %s43, %s46
      %p55 = scmp.eq.s32.totalorder %s24, 3
      %p56 = por %p54, %p55
      %p57 = scmp.ne.s32.totalorder %s46, %s47
      %p58 = scmp.eq.s32.totalorder %s24, 0
      %p59 = por %p57, %p58
      %p60 = scmp.ne.s32.totalorder %s46, %s47
      %p61 = scmp.eq.s32.totalorder %s25, 3
      %p62 = por %p60, %p61
      %p64 = scmp.ne.s32.totalorder %s47, %s63
      %p65 = scmp.eq.s32.totalorder %s25, 0
      %p66 = por %p64, %p65
      %s67 = ssub.s32 %s26, %s38
      %p68 = scmp.eq.s32.totalorder %s67, 0
      %s70 = sadd.s32 %s69, 1
      %s71 = scalar_select %p68, %s69, %s70
      %p74 = pneg %p68
      %p75 = scmp.eq.s32.totalorder %s19, 3
      %p76 = por %p74, %p75
      %p77 = scmp.ne.s32.totalorder %s69, %s72
      %p78 = scmp.eq.s32.totalorder %s19, 0
      %p79 = por %p77, %p78
      %p80 = scmp.ne.s32.totalorder %s69, %s72
      %p81 = scmp.eq.s32.totalorder %s24, 3
      %p82 = por %p80, %p81
      %p83 = scmp.ne.s32.totalorder %s72, %s73
      %p84 = scmp.eq.s32.totalorder %s24, 0
      %p85 = por %p83, %p84
      %p86 = scmp.ne.s32.totalorder %s72, %s73
      %p87 = scmp.eq.s32.totalorder %s25, 3
      %p88 = por %p86, %p87
      %p90 = scmp.ne.s32.totalorder %s73, %s89
      %p91 = scmp.eq.s32.totalorder %s25, 0
      %p92 = por %p90, %p91
      %s94 = sadd.s32 %s93, 1
      %p97 = scmp.eq.s32.totalorder %s19, 3
      %p98 = scmp.ne.s32.totalorder %s93, %s95
      %p99 = scmp.eq.s32.totalorder %s19, 0
      %p100 = por %p98, %p99
      %p101 = scmp.ne.s32.totalorder %s93, %s95
      %p102 = scmp.eq.s32.totalorder %s24, 3
      %p103 = por %p101, %p102
      %p104 = scmp.ne.s32.totalorder %s95, %s96
      %p105 = scmp.eq.s32.totalorder %s24, 0
      %p106 = por %p104, %p105
      %p107 = scmp.ne.s32.totalorder %s95, %s96
      %p108 = scmp.eq.s32.totalorder %s25, 3
      %p109 = por %p107, %p108
      %p111 = scmp.ne.s32.totalorder %s96, %s110
      %p112 = scmp.eq.s32.totalorder %s25, 0
      %p113 = por %p111, %p112
      %s115 = sadd.s32 %s114, 1
      %p118 = scmp.eq.s32.totalorder %s19, 3
      %p119 = scmp.ne.s32.totalorder %s114, %s116
      %p120 = scmp.eq.s32.totalorder %s19, 0
      %p121 = por %p119, %p120
      %p122 = scmp.ne.s32.totalorder %s114, %s116
      %p123 = scmp.eq.s32.totalorder %s24, 3
      %p124 = por %p122, %p123
      %p125 = scmp.ne.s32.totalorder %s116, %s117
      %p126 = scmp.eq.s32.totalorder %s24, 0
      %p127 = por %p125, %p126
      %p128 = scmp.ne.s32.totalorder %s116, %s117
      %p129 = scmp.eq.s32.totalorder %s25, 3
      %p130 = por %p128, %p129
      %p132 = scmp.ne.s32.totalorder %s117, %s131
      %p133 = scmp.eq.s32.totalorder %s25, 0
      %p134 = por %p132, %p133
      %s135 = ssub.s32 %s26, %s38
      %s136 = ssub.s32 %s27, %s34
      %s137 = sor.u32 %s135, %s136
      %p138 = scmp.eq.s32.totalorder %s137, 0
      %s140 = sadd.s32 %s139, 1
      %s141 = scalar_select %p138, %s139, %s140
      %p144 = pneg %p138
      %p145 = scmp.eq.s32.totalorder %s19, 3
      %p146 = por %p144, %p145
      %p147 = scmp.ne.s32.totalorder %s139, %s142
      %p148 = scmp.eq.s32.totalorder %s19, 0
      %p149 = por %p147, %p148
      %p150 = scmp.ne.s32.totalorder %s139, %s142
      %p151 = scmp.eq.s32.totalorder %s24, 3
      %p152 = por %p150, %p151
      %p153 = scmp.ne.s32.totalorder %s142, %s143
      %p154 = scmp.eq.s32.totalorder %s24, 0
      %p155 = por %p153, %p154
      %p156 = scmp.ne.s32.totalorder %s142, %s143
      %p157 = scmp.eq.s32.totalorder %s25, 3
      %p158 = por %p156, %p157
      %p160 = scmp.ne.s32.totalorder %s143, %s159
      %p161 = scmp.eq.s32.totalorder %s25, 0
      %p162 = por %p160, %p161
      %p163 = scmp.le.s32.totalorder 1, %s19
      %p164 = scmp.lt.s32.totalorder %s19, 5
      %p165 = pnand %p163, %p164
      %p166 = pneg %p165
      // Predicated region
      $region9: #{tpu_custom_call.1} parent=5 // pred_check
        _
      $region10: #{tpu_custom_call.1} parent=5 // pred_check_branch
        %168 = sbr.rel (%p165) target = $region12
      $region11: #{tpu_custom_call.1} parent=5 // pred_region
        %s169 = ssub.s32 %s19, 1
        // Predicated region
        $region13: #{tpu_custom_call.1} parent=11 // pred_check
          %p170 = pneg %p106
        $region14: #{tpu_custom_call.1} parent=11 // pred_check_branch
          %172 = sbr.rel (%p170) target = $region16
        $region15: #{tpu_custom_call.1} parent=11 // pred_region
          %s174 = ssub.s32 3072, 3072
          %175 = vsyncadd [#allocation6], %s174
          %s176 = sshll.u32 [#allocation7], 4
          %s177 = int_to_ptr.vmem [resolvable:$true] %s176
          %182 = dma.hbm_to_vmem [thread:$0]  %s2, 3072, %s177, [#allocation6], 192, 192, 12
        $region16: #{tpu_custom_call.1} parent=11 // pred_fallthru
          _
        // Predicated region
        $region17: #{tpu_custom_call.1} parent=11 // pred_check
          %p183 = pneg %p127
        $region18: #{tpu_custom_call.1} parent=11 // pred_check_branch
          %185 = sbr.rel (%p183) target = $region20
        $region19: #{tpu_custom_call.1} parent=11 // pred_region
          _
        $region20: #{tpu_custom_call.1} parent=11 // pred_fallthru
          _
      $region12: #{tpu_custom_call.1} parent=5 // pred_fallthru
        _
      %p186 = scmp.lt.s32.totalorder %s19, 4
      // Predicated region
      $region21: #{tpu_custom_call.1} parent=5 // pred_check
        %p187 = pneg %p186
      $region22: #{tpu_custom_call.1} parent=5 // pred_check_branch
        %189 = sbr.rel (%p187) target = $region24
      $region23: #{tpu_custom_call.1} parent=5 // pred_region
        // Predicated region
        $region25: #{tpu_custom_call.1} parent=23 // pred_check
          %p190 = pneg %p53
        $region26: #{tpu_custom_call.1} parent=23 // pred_check_branch
          %192 = sbr.rel (%p190) target = $region28
        $region27: #{tpu_custom_call.1} parent=23 // pred_region
          %s193 = sand.u32 %s43, 1
          %s194 = scalar_lea.sflag [#allocation3], %s193
          %s195 = sand.u32 %s43, 1
          %s196 = smul.addr %s195, 32
          %s197 = scalar_lea.vmem [#allocation2], %s196
          %s198 = smul.u32 4, %s27
          %s200 = ssub.s32 512, 512
          %201 = vsyncadd %s194, %s200
          %s202 = smul.addr %s26, 8
          %s203 = sadd.s32 %s198, %s202
          %s204 = smul.addr %s203, 128
          %s205 = scalar_lea.hbm %s0, %s204
          %s206 = sshll.u32 %s197, 4
          %s207 = int_to_ptr.vmem [resolvable:$true] %s206
          %212 = dma.hbm_to_vmem [thread:$0]  %s205, 512, %s207, %s194, 128, 128, 8
        $region28: #{tpu_custom_call.1} parent=23 // pred_fallthru
          _
        // Predicated region
        $region29: #{tpu_custom_call.1} parent=23 // pred_check
          %p213 = pneg %p79
        $region30: #{tpu_custom_call.1} parent=23 // pred_check_branch
          %215 = sbr.rel (%p213) target = $region32
        $region31: #{tpu_custom_call.1} parent=23 // pred_region
          %s216 = sand.u32 %s19, 1
          %s217 = scalar_lea.sflag [#allocation6], %s216
          %s218 = sand.u32 %s69, 1
          %s219 = smul.addr %s218, 2
          %s220 = scalar_lea.vmem [#allocation5], %s219
          %s222 = ssub.s32 32, 32
          %223 = vsyncadd %s217, %s222
          %s224 = smul.addr %s26, 32
          %s225 = scalar_lea.hbm %s1, %s224
          %s227 = sshll.u32 %s220, 4
          %s228 = int_to_ptr.vmem [resolvable:$true] %s227
          %230 = dma.hbm_to_vmem [thread:$0]  %s225, 32, %s228, %s217
        $region32: #{tpu_custom_call.1} parent=23 // pred_fallthru
          _
      $region24: #{tpu_custom_call.1} parent=5 // pred_fallthru
        _
      %p231 = scmp.le.s32.totalorder 1, %s19
      %p232 = scmp.lt.s32.totalorder %s19, 5
      %p233 = pnand %p231, %p232
      %p234 = pneg %p233
      // Predicated region
      $region33: #{tpu_custom_call.1} parent=5 // pred_check
        _
      $region34: #{tpu_custom_call.1} parent=5 // pred_check_branch
        %236 = sbr.rel (%p233) target = $region36
      $region35: #{tpu_custom_call.1} parent=5 // pred_region
        %s237 = ssub.s32 %s19, 1
        %s238 = sand.u32 %s46, 1
        %s239 = scalar_lea.sflag [#allocation3], %s238
        %s240 = sand.u32 %s46, 1
        %s241 = smul.addr %s240, 32
        %s242 = scalar_lea.vmem [#allocation2], %s241
        // Predicated region
        $region37: #{tpu_custom_call.1} parent=35 // pred_check
          %p243 = pneg %p59
        $region38: #{tpu_custom_call.1} parent=35 // pred_check_branch
          %245 = sbr.rel (%p243) target = $region40
        $region39: #{tpu_custom_call.1} parent=35 // pred_region
          %246 = dma.done %s239, 512
        $region40: #{tpu_custom_call.1} parent=35 // pred_fallthru
          _
        %s247 = sand.u32 %s24, 1
        %s248 = scalar_lea.sflag [#allocation6], %s247
        %s249 = sand.u32 %s72, 1
        %s250 = smul.addr %s249, 2
        %s251 = scalar_lea.vmem [#allocation5], %s250
        // Predicated region
        $region41: #{tpu_custom_call.1} parent=35 // pred_check
          %p252 = pneg %p85
        $region42: #{tpu_custom_call.1} parent=35 // pred_check_branch
          %254 = sbr.rel (%p252) target = $region44
        $region43: #{tpu_custom_call.1} parent=35 // pred_region
          %255 = dma.done %s248, 32
        $region44: #{tpu_custom_call.1} parent=35 // pred_fallthru
          _
        // Predicated region
        $region45: #{tpu_custom_call.1} parent=35 // pred_check
          %p256 = pneg %p106
        $region46: #{tpu_custom_call.1} parent=35 // pred_check_branch
          %258 = sbr.rel (%p256) target = $region48
        $region47: #{tpu_custom_call.1} parent=35 // pred_region
          %259 = dma.done [#allocation6], 3072
        $region48: #{tpu_custom_call.1} parent=35 // pred_fallthru
          _
        %s260 = sand.u32 %s46, 1
        %s261 = scalar_lea.sflag [#allocation3], %s260
        %s262 = sand.u32 %s46, 1
        %s263 = smul.addr %s262, 32
        %s264 = scalar_lea.vmem [#allocation2], %s263
        %p265 = pneg %p59
        %p266 = pneg %p56
        %s267 = sand.u32 %s24, 1
        %s268 = scalar_lea.sflag [#allocation6], %s267
        %s269 = sand.u32 %s72, 1
        %s270 = smul.addr %s269, 2
        %s271 = scalar_lea.vmem [#allocation5], %s270
        %p272 = pneg %p85
        %p273 = pneg %p82
        %p274 = pneg %p106
        %p275 = pneg %p103
        %p276 = pneg %p127
        %p277 = pneg %p124
        %p278 = pneg %p155
        %p279 = pneg %p152
        %s280 = sand.u32 %s142, 1
        %s281 = scalar_lea.sflag [#allocation4], %s280
        %s282 = sand.u32 %s142, 1
        %s283 = smul.addr %s282, 48
        %s284 = scalar_lea.vmem [#allocation8], %s283
        %s285 = smul.u32 4, %s29
        %s286 = smul.u32 4, %s29
        %v288 = vld [vmem:[%s242] sm:$0xff]
        %v289 = vld [vmem:[%s242 + $0x8] sm:$0xff]
        %v290 = vld [vmem:[%s242 + $0x10] sm:$0xff]
        %v291 = vld [vmem:[%s242 + $0x18] sm:$0xff]
        %v292 = vld [vmem:[%s251] sm:$0x3]
        %v293 = vlaneseq
        %v294 = vshrl.u32 %v293, 7
        %v295 = vsub.s32 0, %v294
        %v296 = vrot.slane %v292, %v295
        %v297 = vmul.f32 %v288, %v296
        %v298 = vmul.f32 %v289, %v296
        %v299 = vmul.f32 %v290, %v296
        %v300 = vmul.f32 %v291, %v296
        %v301 = vlaneseq
        %v302 = vshrl.u32 %v301, 7
        %v303 = vsub.s32 1, %v302
        %v304 = vrot.slane %v292, %v303
        %v305 = vadd.f32 %v297, %v304
        %v306 = vadd.f32 %v298, %v304
        %v307 = vadd.f32 %v299, %v304
        %v308 = vadd.f32 %v300, %v304
        %v309 = vpack.c.bf16 %v306, %v305
        %v310 = vpack.c.bf16 %v308, %v307
        %v311 = vld [vmem:[#allocation7] sm:$0xff]
        %v312 = vld [vmem:[#allocation7 + $0x8] sm:$0xf]
        %v313 = vld [vmem:[#allocation7 + $0xc] sm:$0xff]
        %v314 = vld [vmem:[#allocation7 + $0x14] sm:$0xf]
        %v315 = vld [vmem:[#allocation7 + $0x18] sm:$0xff]
        %v316 = vld [vmem:[#allocation7 + $0x20] sm:$0xf]
        %v317 = vld [vmem:[#allocation7 + $0x24] sm:$0xff]
        %v318 = vld [vmem:[#allocation7 + $0x2c] sm:$0xf]
        %v319 = vld [vmem:[#allocation7 + $0x30] sm:$0xff]
        %v320 = vld [vmem:[#allocation7 + $0x38] sm:$0xf]
        %v321 = vld [vmem:[#allocation7 + $0x3c] sm:$0xff]
        %v322 = vld [vmem:[#allocation7 + $0x44] sm:$0xf]
        %v323 = vld [vmem:[#allocation7 + $0x48] sm:$0xff]
        %v324 = vld [vmem:[#allocation7 + $0x50] sm:$0xf]
        %v325 = vld [vmem:[#allocation7 + $0x54] sm:$0xff]
        %v326 = vld [vmem:[#allocation7 + $0x5c] sm:$0xf]
        %v327 = vld [vmem:[#allocation7 + $0x60] sm:$0xff]
        %v328 = vld [vmem:[#allocation7 + $0x68] sm:$0xf]
        %v329 = vld [vmem:[#allocation7 + $0x6c] sm:$0xff]
        %v330 = vld [vmem:[#allocation7 + $0x74] sm:$0xf]
        %v331 = vld [vmem:[#allocation7 + $0x78] sm:$0xff]
        %v332 = vld [vmem:[#allocation7 + $0x80] sm:$0xf]
        %v333 = vld [vmem:[#allocation7 + $0x84] sm:$0xff]
        %v334 = vld [vmem:[#allocation7 + $0x8c] sm:$0xf]
        %v335 = vld [vmem:[#allocation7 + $0x90] sm:$0xff]
        %v336 = vld [vmem:[#allocation7 + $0x98] sm:$0xf]
        %v337 = vld [vmem:[#allocation7 + $0x9c] sm:$0xff]
        %v338 = vld [vmem:[#allocation7 + $0xa4] sm:$0xf]
        %v339 = vld [vmem:[#allocation7 + $0xa8] sm:$0xff]
        %v340 = vld [vmem:[#allocation7 + $0xb0] sm:$0xf]
        %v341 = vld [vmem:[#allocation7 + $0xb4] sm:$0xff]
        %v342 = vld [vmem:[#allocation7 + $0xbc] sm:$0xf]
        %v343 = vld [vmem:[%s3] sm:$0x7]
        %v345 = vlaneseq
        %v346 = vshrl.u32 %v345, 7
        %v347 = vsub.s32 0, %v346
        %v348 = vrot.slane %v343, %v347
        %v349 = vlaneseq
        %v350 = vshrl.u32 %v349, 7
        %v351 = vsub.s32 1, %v350
        %v352 = vrot.slane %v343, %v351
        %v353 = vlaneseq
        %v354 = vshrl.u32 %v353, 7
        %v355 = vsub.s32 2, %v354
        %v356 = vrot.slane %v343, %v355
        %v392 = vunpack.c.l.b16 %v311
        %v393 = vunpack.c.h.b16 %v311
        %v394 = vunpack.c.l.b16 %v312
        %v395 = vunpack.c.l.b16 %v313
        %v396 = vunpack.c.h.b16 %v313
        %v397 = vunpack.c.l.b16 %v314
        %v398 = vunpack.c.l.b16 %v315
        %v399 = vunpack.c.h.b16 %v315
        %v400 = vunpack.c.l.b16 %v316
        %v401 = vunpack.c.l.b16 %v317
        %v402 = vunpack.c.h.b16 %v317
        %v403 = vunpack.c.l.b16 %v318
        %v404 = vunpack.c.l.b16 %v319
        %v405 = vunpack.c.h.b16 %v319
        %v406 = vunpack.c.l.b16 %v320
        %v407 = vunpack.c.l.b16 %v321
        %v408 = vunpack.c.h.b16 %v321
        %v409 = vunpack.c.l.b16 %v322
        %v410 = vunpack.c.l.b16 %v323
        %v411 = vunpack.c.h.b16 %v323
        %v412 = vunpack.c.l.b16 %v324
        %v413 = vunpack.c.l.b16 %v325
        %v414 = vunpack.c.h.b16 %v325
        %v415 = vunpack.c.l.b16 %v326
        %v416 = vunpack.c.l.b16 %v327
        %v417 = vunpack.c.h.b16 %v327
        %v418 = vunpack.c.l.b16 %v328
        %v419 = vunpack.c.l.b16 %v329
        %v420 = vunpack.c.h.b16 %v329
        %v421 = vunpack.c.l.b16 %v330
        %v422 = vunpack.c.l.b16 %v331
        %v423 = vunpack.c.h.b16 %v331
        %v424 = vunpack.c.l.b16 %v332
        %v425 = vunpack.c.l.b16 %v333
        %v426 = vunpack.c.h.b16 %v333
        %v427 = vunpack.c.l.b16 %v334
        %v428 = vunpack.c.l.b16 %v335
        %v429 = vunpack.c.h.b16 %v335
        %v430 = vunpack.c.l.b16 %v336
        %v431 = vunpack.c.l.b16 %v337
        %v432 = vunpack.c.h.b16 %v337
        %v433 = vunpack.c.l.b16 %v338
        %v434 = vunpack.c.l.b16 %v339
        %v435 = vunpack.c.h.b16 %v339
        %v436 = vunpack.c.l.b16 %v340
        %v437 = vunpack.c.l.b16 %v341
        %v438 = vunpack.c.h.b16 %v341
        %v439 = vunpack.c.l.b16 %v342
        %v440 = vpack.c.b16 %v395, %v392
        %v441 = vpack.c.b16 %v396, %v393
        %v442 = vpack.c.b16 %v397, %v394
        %v443 = vpack.c.b16 %v401, %v398
        %v444 = vpack.c.b16 %v402, %v399
        %v445 = vpack.c.b16 %v403, %v400
        %v446 = vpack.c.b16 %v407, %v404
        %v447 = vpack.c.b16 %v408, %v405
        %v448 = vpack.c.b16 %v409, %v406
        %v449 = vpack.c.b16 %v413, %v410
        %v450 = vpack.c.b16 %v414, %v411
        %v451 = vpack.c.b16 %v415, %v412
        %v452 = vpack.c.b16 %v419, %v416
        %v453 = vpack.c.b16 %v420, %v417
        %v454 = vpack.c.b16 %v421, %v418
        %v455 = vpack.c.b16 %v425, %v422
        %v456 = vpack.c.b16 %v426, %v423
        %v457 = vpack.c.b16 %v427, %v424
        %v458 = vpack.c.b16 %v431, %v428
        %v459 = vpack.c.b16 %v432, %v429
        %v460 = vpack.c.b16 %v433, %v430
        %v461 = vpack.c.b16 %v437, %v434
        %v462 = vpack.c.b16 %v438, %v435
        %v463 = vpack.c.b16 %v439, %v436
        %488 = vmatprep.subr.bf16.mxu0 %v441
        %489 = vmatpush1.bf16.msra.mxu0 %v440
        %490 = vmatprep.subr.bf16.mxu0 %v444
        %491 = vmatpush1.bf16.msra.mxu0 %v443
        %492 = vmatprep.subr.bf16.mxu0 %v447
        %493 = vmatpush1.bf16.msra.mxu0 %v446
        %494 = vmatprep.subr.bf16.mxu0 %v450
        %495 = vmatpush1.bf16.msra.mxu0 %v449
        %496 = vmatprep.subr.bf16.mxu0 %v453
        %497 = vmatpush1.bf16.msra.mxu0 %v452
        %498 = vmatprep.subr.bf16.mxu0 %v456
        %499 = vmatpush1.bf16.msra.mxu0 %v455
        %500 = vmatprep.subr.bf16.mxu0 %v459
        %501 = vmatpush1.bf16.msra.mxu0 %v458
        %502 = vmatprep.subr.bf16.mxu0 %v462
        %503 = vmatpush1.bf16.msra.mxu0 %v461
        %504 = vmatprep.subr.bf16.mxu0 0
        %505 = vmatpush1.bf16.msra.mxu0 0
        %506 = vmatprep.subr.bf16.mxu0 0
        %507 = vmatpush1.bf16.msra.mxu0 0
        %508 = vmatprep.subr.bf16.mxu0 0
        %509 = vmatpush1.bf16.msra.mxu0 0
        %510 = vmatprep.subr.bf16.mxu0 0
        %511 = vmatpush1.bf16.msra.mxu0 0
        %512 = vmatprep.subr.bf16.mxu0 0
        %513 = vmatpush1.bf16.msra.mxu0 0
        %514 = vmatprep.subr.bf16.mxu0 0
        %515 = vmatpush1.bf16.msra.mxu0 0
        %516 = vmatprep.subr.bf16.mxu0 0
        %517 = vmatpush1.bf16.msra.mxu0 0
        %518 = vmatprep.subr.bf16.mxu0 0
        %519 = vmatpush1.bf16.msra.mxu0 0
        %520 = vmatprep.mubr.bf16.mxu0 0
        %521 = vmatmul.mubr.bf16.gmra.mrb[0].mxu0 %v309
        %v522 = vpop.f32.mrb[0].mxu0
        %v523 = vadd.f32 %v348, %v522
        %v524 = vpop.f32.mrb[0].mxu0
        %v525 = vadd.f32 %v352, %v524
        %v526 = vpop.f32.mrb[0].mxu0
        %v527 = vadd.f32 %v348, %v526
        %v528 = vpop.f32.mrb[0].mxu0
        %v529 = vadd.f32 %v352, %v528
        %530 = vmatprep.mubr.bf16.mxu0 0
        %531 = vmatmul.mubr.bf16.gmra.mrb[0].mxu0 %v310
        %v532 = vpop.f32.mrb[0].mxu0
        %v533 = vadd.f32 %v348, %v532
        %v534 = vpop.f32.mrb[0].mxu0
        %v535 = vadd.f32 %v352, %v534
        %v536 = vpop.f32.mrb[0].mxu0
        %v537 = vadd.f32 %v348, %v536
        %v538 = vpop.f32.mrb[0].mxu0
        %v539 = vadd.f32 %v352, %v538
        %540 = vdwg.mxu0
        %541 = vmatprep.subr.bf16.mxu0 0
        %542 = vmatpush1.bf16.msra.mxu0 %v442
        %543 = vmatprep.subr.bf16.mxu0 0
        %544 = vmatpush1.bf16.msra.mxu0 %v445
        %545 = vmatprep.subr.bf16.mxu0 0
        %546 = vmatpush1.bf16.msra.mxu0 %v448
        %547 = vmatprep.subr.bf16.mxu0 0
        %548 = vmatpush1.bf16.msra.mxu0 %v451
        %549 = vmatprep.subr.bf16.mxu0 0
        %550 = vmatpush1.bf16.msra.mxu0 %v454
        %551 = vmatprep.subr.bf16.mxu0 0
        %552 = vmatpush1.bf16.msra.mxu0 %v457
        %553 = vmatprep.subr.bf16.mxu0 0
        %554 = vmatpush1.bf16.msra.mxu0 %v460
        %555 = vmatprep.subr.bf16.mxu0 0
        %556 = vmatpush1.bf16.msra.mxu0 %v463
        %557 = vmatprep.subr.bf16.mxu0 0
        %558 = vmatpush1.bf16.msra.mxu0 0
        %559 = vmatprep.subr.bf16.mxu0 0
        %560 = vmatpush1.bf16.msra.mxu0 0
        %561 = vmatprep.subr.bf16.mxu0 0
        %562 = vmatpush1.bf16.msra.mxu0 0
        %563 = vmatprep.subr.bf16.mxu0 0
        %564 = vmatpush1.bf16.msra.mxu0 0
        %565 = vmatprep.subr.bf16.mxu0 0
        %566 = vmatpush1.bf16.msra.mxu0 0
        %567 = vmatprep.subr.bf16.mxu0 0
        %568 = vmatpush1.bf16.msra.mxu0 0
        %569 = vmatprep.subr.bf16.mxu0 0
        %570 = vmatpush1.bf16.msra.mxu0 0
        %571 = vmatprep.subr.bf16.mxu0 0
        %572 = vmatpush1.bf16.msra.mxu0 0
        %573 = vmatprep.mubr.bf16.mxu0 0
        %574 = vmatmul.mubr.bf16.gmra.mrb[0].mxu0 %v309
        %v575 = vpop.f32.mrb[0].mxu0
        %v576 = vadd.f32 %v356, %v575
        %v577 = vpop.f32.mrb[0].mxu0
        %v578 = vpop.f32.mrb[0].mxu0
        %v579 = vadd.f32 %v356, %v578
        %v580 = vpop.f32.mrb[0].mxu0
        %581 = vmatprep.mubr.bf16.mxu0 0
        %582 = vmatmul.mubr.bf16.gmra.mrb[0].mxu0 %v310
        %v583 = vpop.f32.mrb[0].mxu0
        %v584 = vadd.f32 %v356, %v583
        %v585 = vpop.f32.mrb[0].mxu0
        %v586 = vpop.f32.mrb[0].mxu0
        %v587 = vadd.f32 %v356, %v586
        %v588 = vpop.f32.mrb[0].mxu0
        %589 = vdwg.mxu0
        %v590 = vpack.c.bf16 %v527, %v523
        %v591 = vpack.c.bf16 %v529, %v525
        %v592 = vpack.c.bf16 %v579, %v576
        %v593 = vpack.c.bf16 %v537, %v533
        %v594 = vpack.c.bf16 %v539, %v535
        %v595 = vpack.c.bf16 %v587, %v584
        %v602 = vunpack.c.l.b16 %v590
        %v603 = vunpack.c.l.b16 %v591
        %v604 = vunpack.c.l.b16 %v592
        %v605 = vunpack.c.h.b16 %v590
        %v606 = vunpack.c.h.b16 %v591
        %v607 = vunpack.c.h.b16 %v592
        %v608 = vunpack.c.l.b16 %v593
        %v609 = vunpack.c.l.b16 %v594
        %v610 = vunpack.c.l.b16 %v595
        %v611 = vunpack.c.h.b16 %v593
        %v612 = vunpack.c.h.b16 %v594
        %v613 = vunpack.c.h.b16 %v595
        %v614 = vpack.c.b16 %v603, %v602
        %v615 = vpack.c.b16 %v604, %v604
        %v616 = vpack.c.b16 %v606, %v605
        %v617 = vpack.c.b16 %v607, %v607
        %v618 = vpack.c.b16 %v609, %v608
        %v619 = vpack.c.b16 %v610, %v610
        %v620 = vpack.c.b16 %v612, %v611
        %v621 = vpack.c.b16 %v613, %v613
        %630 = vst [vmem:[%s284] sm:$0xff] %v614
        %631 = vst [vmem:[%s284 + $0x8] sm:$0xf] %v615
        %632 = vst [vmem:[%s284 + $0xc] sm:$0xff] %v616
        %633 = vst [vmem:[%s284 + $0x14] sm:$0xf] %v617
        %634 = vst [vmem:[%s284 + $0x18] sm:$0xff] %v618
        %635 = vst [vmem:[%s284 + $0x20] sm:$0xf] %v619
        %636 = vst [vmem:[%s284 + $0x24] sm:$0xff] %v620
        %637 = vst [vmem:[%s284 + $0x2c] sm:$0xf] %v621
        %s638 = sand.u32 %s142, 1
        %s639 = scalar_lea.sflag [#allocation4], %s638
        %s640 = sand.u32 %s142, 1
        %s641 = smul.addr %s640, 48
        %s642 = scalar_lea.vmem [#allocation8], %s641
        // Predicated region
        $region49: #{tpu_custom_call.1} parent=35 // pred_check
          %p643 = pneg %p152
        $region50: #{tpu_custom_call.1} parent=35 // pred_check_branch
          %645 = sbr.rel (%p643) target = $region52
        $region51: #{tpu_custom_call.1} parent=35 // pred_region
          %s646 = smul.u32 4, %s29
          %s648 = ssub.s32 768, 768
          %649 = vsyncadd %s639, %s648
          %s650 = smul.addr %s646, 3
          %s651 = smul.addr %s28, 24
          %s652 = sadd.s32 %s650, %s651
          %s653 = smul.addr %s652, 64
          %s654 = scalar_lea.hbm %s4, %s653
          %s655 = sshll.u32 %s642, 4
          %s656 = int_to_ptr.vmem [resolvable:$true] %s655
          %661 = dma.vmem_to_hbm [thread:$0]  %s656, 768, %s654, %s639, 192, 192, 12
        $region52: #{tpu_custom_call.1} parent=35 // pred_fallthru
          _
      $region36: #{tpu_custom_call.1} parent=5 // pred_fallthru
        _
      %p662 = scmp.le.s32.totalorder 2, %s19
      // Predicated region
      $region53: #{tpu_custom_call.1} parent=5 // pred_check
        %p663 = pneg %p662
      $region54: #{tpu_custom_call.1} parent=5 // pred_check_branch
        %665 = sbr.rel (%p663) target = $region56
      $region55: #{tpu_custom_call.1} parent=5 // pred_region
        %s666 = ssub.s32 %s19, 2
        // Predicated region
        $region57: #{tpu_custom_call.1} parent=55 // pred_check
          %p667 = pneg %p158
        $region58: #{tpu_custom_call.1} parent=55 // pred_check_branch
          %669 = sbr.rel (%p667) target = $region60
        $region59: #{tpu_custom_call.1} parent=55 // pred_region
          %s670 = sand.u32 %s143, 1
          %s671 = scalar_lea.sflag [#allocation4], %s670
          %s672 = sand.u32 %s143, 1
          %s673 = smul.addr %s672, 48
          %s674 = scalar_lea.vmem [#allocation8], %s673
          %675 = dma.done %s671, 768
        $region60: #{tpu_custom_call.1} parent=55 // pred_fallthru
          _
      $region56: #{tpu_custom_call.1} parent=5 // pred_fallthru
        _
    $region6: #{tpu_custom_call.1} parent=1 // loop_footer
      %s23 = sadd.s32 1, %s19
    $region7: #{tpu_custom_call.1} parent=1 // loop_footer_branch
      %18 = sbr.rel target = $region3
    $region8: #{tpu_custom_call.1} parent=1 // loop_exit
      _
    %676 = vsyncpa [#allocation3], 1
    %s677 = scalar_lea.sflag [#allocation3], 1
    %678 = vsyncpa %s677, 1
    %679 = vsyncpa [#allocation6], 1
    %s680 = scalar_lea.sflag [#allocation6], 1
    %681 = vsyncpa %s680, 1
    %682 = vsyncpa [#allocation4], 1
    %s683 = scalar_lea.sflag [#allocation4], 1
    %684 = vsyncpa %s683, 1

</llo_original>
